<compile_context>
chip_gen: v7x
topology: tpu7x:2x2x1
jax: 0.10.0
libtpu: 0.0.40
codegen_flags: <defaults>
</compile_context>

<pallas_src>
import jax
import jax.numpy as jnp
from jax.experimental import pallas as pl
from jax.experimental.pallas import tpu as pltpu

WORD_DIM = 50
NUM_WORDS = 5
IN_DIM = NUM_WORDS * WORD_DIM          # 250
HIDDEN_DIM = WORD_DIM                  # 50
NUM_CLASSES = 5

HIDDEN_PAD = 128    # hidden 50  -> 128 (lane friendly)
OUT_PAD = 128       # classes 5  -> 128 (lane-dense, unmasked vst output)


def _round_up(x, m):
    return (x + m - 1) // m * m


def embnet_kernel(ids_ref, m_ref, b1_ref, w2_ref, b2_ref, out_ref):
    """One batch tile: fused gather+Linear1 (single K=5*VOCAB_PAD matmul),
    tanh (sigmoid constants folded into the weights), then Linear2."""
    ids = ids_ref[...]                        # [TB, NUM_WORDS] int32
    tb = ids.shape[0]
    vocab_pad = m_ref.shape[0] // NUM_WORDS

    vocab_iota = jax.lax.broadcasted_iota(jnp.int32, (tb, vocab_pad), 1)
    # One-hot per word position, concatenated along the lane axis; the 128-
    # aligned concat is essentially free vreg placement.
    onehot = jnp.concatenate(
        [(ids[:, j:j + 1] == vocab_iota).astype(jnp.float32)
         for j in range(NUM_WORDS)],
        axis=1)                               # [TB, NUM_WORDS * VOCAB_PAD]

    # z' = 0.5 * (flatten(E[ids]) @ W1^T + b1): Linear1 folded into the table
    # (M = E @ W1^T) and the 0.5 sigmoid pre-scale folded into M / b1.
    z = jnp.dot(onehot, m_ref[...],
                preferred_element_type=jnp.float32) + b1_ref[...]

    # sigmoid(z) = 0.5*tanh(0.5*z) + 0.5; affine parts folded into W2'/b2'.
    h = jnp.tanh(z)

    # Padded hidden lanes: z'=0 -> tanh(0)=0, and the matching rows of W2' are
    # zero, so they contribute nothing.
    out_ref[...] = (jnp.dot(h, w2_ref[...], preferred_element_type=jnp.float32)
                    + b2_ref[...])


def prepare_embnet_params(emb_table, w1, b1, w2):
    """One-time prep: fold Linear1 into the embedding table, fold sigmoid's
    affine constants into the weights, pre-transpose and zero-pad."""
    vocab = emb_table.shape[0]
    vocab_pad = _round_up(max(vocab, 8), 128)
    hp = jax.lax.Precision.HIGHEST

    emb_f = emb_table.astype(jnp.float32)                         # [V, 50]
    # w1: [HIDDEN, 5*50] -> per-position transposed [5, 50, HIDDEN]
    w1t = jnp.transpose(
        w1.astype(jnp.float32).reshape(HIDDEN_DIM, NUM_WORDS, WORD_DIM),
        (1, 2, 0))
    # M_j = E @ W1_j^T   (flatten(E[ids]) @ W1^T == sum_j onehot_j @ M_j)
    m = jnp.einsum('vd,jdh->jvh', emb_f, w1t, precision=hp)       # [5, V, H]

    # Fold sigmoid pre-scale (0.5), zero-pad, stack along the K axis.
    m_p = jnp.zeros((NUM_WORDS, vocab_pad, HIDDEN_PAD), jnp.float32)
    m_p = m_p.at[:, :vocab, :HIDDEN_DIM].set(0.5 * m)
    m_p = m_p.reshape(NUM_WORDS * vocab_pad, HIDDEN_PAD)

    b1_p = jnp.zeros((1, HIDDEN_PAD), jnp.float32)
    b1_p = b1_p.at[0, :HIDDEN_DIM].set(0.5 * b1.astype(jnp.float32))

    # y = sigmoid(z) @ W2^T = tanh(0.5*z) @ (0.5*W2^T) + 0.5*sum_k W2^T[k,:]
    w2t = w2.astype(jnp.float32).T                                # [H, OUT]
    w2_p = jnp.zeros((HIDDEN_PAD, OUT_PAD), jnp.float32)
    w2_p = w2_p.at[:HIDDEN_DIM, :NUM_CLASSES].set(0.5 * w2t)
    b2_p = jnp.zeros((1, OUT_PAD), jnp.float32)
    b2_p = b2_p.at[0, :NUM_CLASSES].set(0.5 * jnp.sum(w2t, axis=0))

    return m_p, b1_p, w2_p, b2_p


def embnet_forward(x_ids, m_p, b1_p, w2_p, b2_p):
    """x_ids: [B, 5] int ids. Returns [B, NUM_CLASSES] float32."""
    B = x_ids.shape[0]
    # Batch tile: multiple of 8 sublanes, capped at 256 (fills the 256x256 MXU
    # on v6e/v7x; per-step VMEM stays < ~2 MB).  If the whole batch fits in one
    # tile but is splittable, halve the tile so the "parallel" grid axis has
    # >= 2 steps (keeps both TensorCores busy on v7x / megacore).
    TB = min(256, _round_up(B, 8))
    if TB >= 16 and _round_up(B, TB) == TB:
        TB = _round_up(TB // 2, 8)
    B_pad = _round_up(B, TB)
    grid = (B_pad // TB,)

    # NOTE: out-of-range ids silently map to zero embeddings (the reference
    # module would raise); document / assert upstream if that matters.
    ids_p = jnp.zeros((B_pad, NUM_WORDS), jnp.int32).at[:B].set(
        x_ids.astype(jnp.int32))

    k_dim = m_p.shape[0]      # NUM_WORDS * vocab_pad
    flops = 2 * B_pad * (k_dim * HIDDEN_PAD + HIDDEN_PAD * OUT_PAD)
    bytes_accessed = 4 * (ids_p.size + m_p.size + b1_p.size + w2_p.size
                          + b2_p.size + B_pad * OUT_PAD)

    out = pl.pallas_call(
        embnet_kernel,
        out_shape=jax.ShapeDtypeStruct((B_pad, OUT_PAD), jnp.float32),
        grid_spec=pltpu.PrefetchScalarGridSpec(
            num_scalar_prefetch=0,
            grid=grid,
            in_specs=[
                pl.BlockSpec((TB, NUM_WORDS), lambda i: (i, 0)),        # ids tile
                pl.BlockSpec((k_dim, HIDDEN_PAD), lambda i: (0, 0)),    # 0.5*(E@W1^T), stacked
                pl.BlockSpec((1, HIDDEN_PAD), lambda i: (0, 0)),        # 0.5*b1
                pl.BlockSpec((HIDDEN_PAD, OUT_PAD), lambda i: (0, 0)),  # 0.5*W2^T
                pl.BlockSpec((1, OUT_PAD), lambda i: (0, 0)),           # folded bias2
            ],
            out_specs=pl.BlockSpec((TB, OUT_PAD), lambda i: (i, 0)),
        ),
        compiler_params=pltpu.CompilerParams(
            dimension_semantics=("parallel",)),
        cost_estimate=pl.CostEstimate(
            flops=int(flops),
            transcendentals=int(B_pad * HIDDEN_PAD),
            bytes_accessed=int(bytes_accessed)),
    )(ids_p, m_p, b1_p, w2_p, b2_p)

    return out[:B, :NUM_CLASSES]


def reference_forward(x_ids, emb_table, w1, b1, w2):
    hp = jax.lax.Precision.HIGHEST
    emb = jnp.take(emb_table, x_ids, axis=0)
    win = emb.reshape(x_ids.shape[0], -1)
    z = jnp.dot(win, w1.T, precision=hp) + b1
    h = jax.nn.sigmoid(z)
    return jnp.dot(h, w2.T, precision=hp)


if __name__ == "__main__":
    key = jax.random.PRNGKey(0)
    k_emb, k_w1, k_b1, k_w2, k_x = jax.random.split(key, 5)

    VOCAB = 100
    B = 8

    # Deterministic parameter init (shapes match the module's __init__).
    emb_table = jax.random.normal(k_emb, (VOCAB, WORD_DIM), dtype=jnp.float32)
    lim1 = 1.0 / jnp.sqrt(jnp.float32(IN_DIM))
    w1 = jax.random.uniform(k_w1, (HIDDEN_DIM, IN_DIM),
                            minval=-lim1, maxval=lim1, dtype=jnp.float32)
    b1 = jax.random.uniform(k_b1, (HIDDEN_DIM,),
                            minval=-lim1, maxval=lim1, dtype=jnp.float32)
    lim2 = 1.0 / jnp.sqrt(jnp.float32(HIDDEN_DIM))
    w2 = jax.random.uniform(k_w2, (NUM_CLASSES, HIDDEN_DIM),
                            minval=-lim2, maxval=lim2, dtype=jnp.float32)

    x_ids = jax.random.randint(k_x, (B, NUM_WORDS), 0, VOCAB, dtype=jnp.int32)

    # One-time parameter prep (fold + transpose + pad), then the fused kernel.
    params = prepare_embnet_params(emb_table, w1, b1, w2)
    fwd = jax.jit(embnet_forward)

    y = jax.block_until_ready(fwd(x_ids, *params))

    y_ref = reference_forward(x_ids, emb_table, w1, b1, w2)
    assert y.shape == (B, NUM_CLASSES)
    assert jnp.allclose(y, y_ref, atol=1e-3, rtol=1e-2), (
        float(jnp.max(jnp.abs(y - y_ref))))

    print("KERNEL_OK")
</pallas_src>

<mosaic_0001>
module attributes {stable_mosaic.version = 11 : i64} {
  func.func @embnet_kernel(%arg0: i32, %arg1: memref<8x5xi32, #tpu.memory_space<vmem>>, %arg2: memref<640x128xf32, #tpu.memory_space<vmem>>, %arg3: memref<1x128xf32, #tpu.memory_space<vmem>>, %arg4: memref<128x128xf32, #tpu.memory_space<vmem>>, %arg5: memref<1x128xf32, #tpu.memory_space<vmem>>, %arg6: memref<8x128xf32, #tpu.memory_space<vmem>>) attributes {dimension_semantics = [#tpu.dimension_semantics<parallel>], iteration_bounds = array<i64: 1>, scalar_prefetch = 0 : i64, scratch_operands = 0 : i64, tpu.core_type = #tpu.core_type<tc>, window_params = [{transform_indices = @transform_0, window_bounds = array<i64: 8, 5>}, {pipeline_mode = #tpu.pipeline_mode<synchronous>, transform_indices = @transform_1, window_bounds = array<i64: 640, 128>}, {pipeline_mode = #tpu.pipeline_mode<synchronous>, transform_indices = @transform_2, window_bounds = array<i64: 1, 128>}, {pipeline_mode = #tpu.pipeline_mode<synchronous>, transform_indices = @transform_3, window_bounds = array<i64: 128, 128>}, {pipeline_mode = #tpu.pipeline_mode<synchronous>, transform_indices = @transform_4, window_bounds = array<i64: 1, 128>}, {transform_indices = @transform_5, window_bounds = array<i64: 8, 128>}]} {
    %c0 = arith.constant 0 : index
    %c0_0 = arith.constant 0 : index
    %0 = vector.load %arg1[%c0, %c0_0] : memref<8x5xi32, #tpu.memory_space<vmem>>, vector<8x5xi32>
    %1 = tpu.iota {dimensions = array<i32: 1>} : vector<8x128xi32>
    %2 = vector.extract_strided_slice %0 {offsets = [0, 0], sizes = [8, 1], strides = [1, 1]} : vector<8x5xi32> to vector<8x1xi32>
    %3 = vector.broadcast %2 : vector<8x1xi32> to vector<8x128xi32>
    %4 = arith.cmpi eq, %3, %1 : vector<8x128xi32>
    %5 = arith.extui %4 : vector<8x128xi1> to vector<8x128xi32>
    %6 = arith.sitofp %5 : vector<8x128xi32> to vector<8x128xf32>
    %7 = vector.extract_strided_slice %0 {offsets = [0, 1], sizes = [8, 1], strides = [1, 1]} : vector<8x5xi32> to vector<8x1xi32>
    %8 = vector.broadcast %7 : vector<8x1xi32> to vector<8x128xi32>
    %9 = arith.cmpi eq, %8, %1 : vector<8x128xi32>
    %10 = arith.extui %9 : vector<8x128xi1> to vector<8x128xi32>
    %11 = arith.sitofp %10 : vector<8x128xi32> to vector<8x128xf32>
    %12 = vector.extract_strided_slice %0 {offsets = [0, 2], sizes = [8, 1], strides = [1, 1]} : vector<8x5xi32> to vector<8x1xi32>
    %13 = vector.broadcast %12 : vector<8x1xi32> to vector<8x128xi32>
    %14 = arith.cmpi eq, %13, %1 : vector<8x128xi32>
    %15 = arith.extui %14 : vector<8x128xi1> to vector<8x128xi32>
    %16 = arith.sitofp %15 : vector<8x128xi32> to vector<8x128xf32>
    %17 = vector.extract_strided_slice %0 {offsets = [0, 3], sizes = [8, 1], strides = [1, 1]} : vector<8x5xi32> to vector<8x1xi32>
    %18 = vector.broadcast %17 : vector<8x1xi32> to vector<8x128xi32>
    %19 = arith.cmpi eq, %18, %1 : vector<8x128xi32>
    %20 = arith.extui %19 : vector<8x128xi1> to vector<8x128xi32>
    %21 = arith.sitofp %20 : vector<8x128xi32> to vector<8x128xf32>
    %22 = vector.extract_strided_slice %0 {offsets = [0, 4], sizes = [8, 1], strides = [1, 1]} : vector<8x5xi32> to vector<8x1xi32>
    %23 = vector.broadcast %22 : vector<8x1xi32> to vector<8x128xi32>
    %24 = arith.cmpi eq, %23, %1 : vector<8x128xi32>
    %25 = arith.extui %24 : vector<8x128xi1> to vector<8x128xi32>
    %26 = arith.sitofp %25 : vector<8x128xi32> to vector<8x128xf32>
    %27 = tpu.concatenate %6, %11, %16, %21, %26 in 1 : vector<8x128xf32>, vector<8x128xf32>, vector<8x128xf32>, vector<8x128xf32>, vector<8x128xf32> -> vector<8x640xf32>
    %c0_1 = arith.constant 0 : index
    %c0_2 = arith.constant 0 : index
    %28 = vector.load %arg2[%c0_1, %c0_2] : memref<640x128xf32, #tpu.memory_space<vmem>>, vector<640x128xf32>
    %cst = arith.constant dense<0.000000e+00> : vector<8x128xf32>
    %29 = tpu.matmul %27, %28, %cst {dimension_numbers = #tpu.dot_dimension_numbers<[1], [0], [0], [1], [0, 0, 1, 1], [], []>} : vector<8x640xf32>, vector<640x128xf32>, vector<8x128xf32> -> vector<8x128xf32>
    %c0_3 = arith.constant 0 : index
    %c0_4 = arith.constant 0 : index
    %30 = vector.load %arg3[%c0_3, %c0_4] : memref<1x128xf32, #tpu.memory_space<vmem>>, vector<1x128xf32>
    %31 = vector.broadcast %30 : vector<1x128xf32> to vector<8x128xf32>
    %32 = arith.addf %29, %31 : vector<8x128xf32>
    %33 = math.tanh %32 : vector<8x128xf32>
    %c0_5 = arith.constant 0 : index
    %c0_6 = arith.constant 0 : index
    %34 = vector.load %arg4[%c0_5, %c0_6] : memref<128x128xf32, #tpu.memory_space<vmem>>, vector<128x128xf32>
    %cst_7 = arith.constant dense<0.000000e+00> : vector<8x128xf32>
    %35 = tpu.matmul %33, %34, %cst_7 {dimension_numbers = #tpu.dot_dimension_numbers<[1], [0], [0], [1], [0, 0, 1, 1], [], []>} : vector<8x128xf32>, vector<128x128xf32>, vector<8x128xf32> -> vector<8x128xf32>
    %c0_8 = arith.constant 0 : index
    %c0_9 = arith.constant 0 : index
    %36 = vector.load %arg5[%c0_8, %c0_9] : memref<1x128xf32, #tpu.memory_space<vmem>>, vector<1x128xf32>
    %37 = vector.broadcast %36 : vector<1x128xf32> to vector<8x128xf32>
    %38 = arith.addf %35, %37 : vector<8x128xf32>
    %c0_10 = arith.constant 0 : index
    %c0_11 = arith.constant 0 : index
    %39 = vector.load %arg6[%c0_10, %c0_11] : memref<8x128xf32, #tpu.memory_space<vmem>>, vector<8x128xf32>
    tpu.vector_store %arg6[%c0_10, %c0_11], %38 {strides = array<i32>} : memref<8x128xf32, #tpu.memory_space<vmem>>, vector<8x128xf32>,
    return
  }
  func.func @transform_0(%arg0: i32) -> (i32, i32) {
    %c0_i32 = arith.constant 0 : i32
    %c0_i32_0 = arith.constant 0 : i32
    return %arg0, %c0_i32 : i32, i32
  }
  func.func @transform_1(%arg0: i32) -> (i32, i32) {
    %c0_i32 = arith.constant 0 : i32
    %c0_i32_0 = arith.constant 0 : i32
    %c0_i32_1 = arith.constant 0 : i32
    return %c0_i32, %c0_i32_0 : i32, i32
  }
  func.func @transform_2(%arg0: i32) -> (i32, i32) {
    %c0_i32 = arith.constant 0 : i32
    %c0_i32_0 = arith.constant 0 : i32
    %c0_i32_1 = arith.constant 0 : i32
    return %c0_i32, %c0_i32_0 : i32, i32
  }
  func.func @transform_3(%arg0: i32) -> (i32, i32) {
    %c0_i32 = arith.constant 0 : i32
    %c0_i32_0 = arith.constant 0 : i32
    %c0_i32_1 = arith.constant 0 : i32
    return %c0_i32, %c0_i32_0 : i32, i32
  }
  func.func @transform_4(%arg0: i32) -> (i32, i32) {
    %c0_i32 = arith.constant 0 : i32
    %c0_i32_0 = arith.constant 0 : i32
    %c0_i32_1 = arith.constant 0 : i32
    return %c0_i32, %c0_i32_0 : i32, i32
  }
  func.func @transform_5(%arg0: i32) -> (i32, i32) {
    %c0_i32 = arith.constant 0 : i32
    %c0_i32_0 = arith.constant 0 : i32
    return %arg0, %c0_i32 : i32, i32
  }
}

</mosaic_0001>

<llo_original>
// kernel: embnet_forward.1
$region0: #{embnet_forward.1}
  #allocation0 [shape = 'u32[]', space=smem, size = 0x4, offset = 0x4, fixed_abs, tag = 'smem constant byte address 0x4 - core index']
  #allocation1 [shape = 'u32[144,128]{1,0:T(1,128)}', space=vmem, size = 0x12000, scoped, tag = 'internal scratch']
  %s0 = inlined_call_operand.hbm [shape: s32[8,5], index: 0, kind: input, shape index: {}]
  %s1 = inlined_call_operand.hbm [shape: f32[640,128], index: 1, kind: input, shape index: {}]
  %s2 = inlined_call_operand.vmem [shape: f32[1,128], index: 2, kind: input, shape index: {}]
  %s3 = inlined_call_operand.hbm [shape: f32[128,128], index: 3, kind: input, shape index: {}]
  %s4 = inlined_call_operand.vmem [shape: f32[1,128], index: 4, kind: input, shape index: {}]
  %s5 = inlined_call_operand.hbm [shape: f32[8,128], index: 5, kind: output, shape index: {}]
  %s6 = sld [smem:[#allocation0]]
  $region42: #{embnet_forward.1} parent=0
    _
  %s8 = ssub.s32 1, %s6
  %s9 = scalar_select 0, %s8, %s6
  $region1: #{embnet_forward.1} parent=0
    #allocation2 [shape = 'u8[4096]{0}', space=vmem, size = 0x1000, scoped, tag = 'input window, operand 0, single buffered']
    #allocation3 [shape = 's32[1]{0}', space=sflag, size = 0x4, scoped, tag = 'scoped memory for embnet_forward.1']
    #allocation4 [shape = 's32[1]{0}', space=sflag, size = 0x4, scoped, tag = 'scoped memory for embnet_forward.1']
    #allocation5 [shape = 'u8[327680]{0}', space=vmem, size = 0x50000, scoped, tag = 'input window, operand 1, single buffered']
    #allocation6 [shape = 's32[1]{0}', space=sflag, size = 0x4, scoped, tag = 'scoped memory for embnet_forward.1']
    #allocation7 [shape = 'u8[65536]{0}', space=vmem, size = 0x10000, scoped, tag = 'input window, operand 3, single buffered']
    #allocation8 [shape = 'u8[4096]{0}', space=vmem, size = 0x1000, scoped, tag = 'output window, operand 0, single buffered']
    %10 = vsyncpa [#allocation3], 0
    %11 = vsyncpa [#allocation6], 0
    %12 = vsyncpa [#allocation4], 0
    // Predicated region
    $region2: #{embnet_forward.1} parent=1 // pred_check
      _
    $region3: #{embnet_forward.1} parent=1 // pred_check_branch
      %14 = sbr.rel (0) target = $region5
    $region4: #{embnet_forward.1} parent=1 // pred_region
      %s16 = ssub.s32 128, 128
      %17 = vsyncadd [#allocation3], %s16
      %s19 = sshll.u32 [#allocation2], 4
      %s20 = int_to_ptr.vmem [resolvable:$true] %s19
      %22 = dma.hbm_to_vmem [thread:$0]  %s0, 128, %s20, [#allocation3]
    $region5: #{embnet_forward.1} parent=1 // pred_fallthru
      _
    // Predicated region
    $region6: #{embnet_forward.1} parent=1 // pred_check
      _
    $region7: #{embnet_forward.1} parent=1 // pred_check_branch
      %24 = sbr.rel (0) target = $region9
    $region8: #{embnet_forward.1} parent=1 // pred_region
      %s26 = ssub.s32 10240, 10240
      %27 = vsyncadd [#allocation6], %s26
      %s28 = sshll.u32 [#allocation5], 4
      %s29 = int_to_ptr.vmem [resolvable:$true] %s28
      %34 = dma.hbm_to_vmem [thread:$0]  %s1, 10240, %s29, [#allocation6], 128, 128, 8
    $region9: #{embnet_forward.1} parent=1 // pred_fallthru
      _
    // Predicated region
    $region10: #{embnet_forward.1} parent=1 // pred_check
      _
    $region11: #{embnet_forward.1} parent=1 // pred_check_branch
      %36 = sbr.rel (0) target = $region13
    $region12: #{embnet_forward.1} parent=1 // pred_region
      _
    $region13: #{embnet_forward.1} parent=1 // pred_fallthru
      _
    // Predicated region
    $region14: #{embnet_forward.1} parent=1 // pred_check
      _
    $region15: #{embnet_forward.1} parent=1 // pred_check_branch
      %38 = sbr.rel (0) target = $region17
    $region16: #{embnet_forward.1} parent=1 // pred_region
      %s40 = ssub.s32 2048, 2048
      %41 = vsyncadd [#allocation6], %s40
      %s42 = sshll.u32 [#allocation7], 4
      %s43 = int_to_ptr.vmem [resolvable:$true] %s42
      %48 = dma.hbm_to_vmem [thread:$0]  %s3, 2048, %s43, [#allocation6], 128, 128, 8
    $region17: #{embnet_forward.1} parent=1 // pred_fallthru
      _
    // Predicated region
    $region18: #{embnet_forward.1} parent=1 // pred_check
      _
    $region19: #{embnet_forward.1} parent=1 // pred_check_branch
      %50 = sbr.rel (0) target = $region21
    $region20: #{embnet_forward.1} parent=1 // pred_region
      _
    $region21: #{embnet_forward.1} parent=1 // pred_fallthru
      _
    // Predicated region
    $region22: #{embnet_forward.1} parent=1 // pred_check
      _
    $region23: #{embnet_forward.1} parent=1 // pred_check_branch
      %52 = sbr.rel (0) target = $region25
    $region24: #{embnet_forward.1} parent=1 // pred_region
      %53 = dma.done [#allocation3], 128
    $region25: #{embnet_forward.1} parent=1 // pred_fallthru
      _
    // Predicated region
    $region26: #{embnet_forward.1} parent=1 // pred_check
      _
    $region27: #{embnet_forward.1} parent=1 // pred_check_branch
      %55 = sbr.rel (0) target = $region29
    $region28: #{embnet_forward.1} parent=1 // pred_region
      %56 = dma.done [#allocation6], 10240
    $region29: #{embnet_forward.1} parent=1 // pred_fallthru
      _
    // Predicated region
    $region30: #{embnet_forward.1} parent=1 // pred_check
      _
    $region31: #{embnet_forward.1} parent=1 // pred_check_branch
      %58 = sbr.rel (0) target = $region33
    $region32: #{embnet_forward.1} parent=1 // pred_region
      %59 = dma.done [#allocation6], 2048
    $region33: #{embnet_forward.1} parent=1 // pred_fallthru
      _
    %v60 = vld [vmem:[#allocation2] sm:$0xff]
    %v61 = vlaneseq
    %v62 = vand.u32 %v61, 127
    %63 = vset.pattern.permute.xlu0 0
    %64 = vperm.xlu0 %63, %v60
    %v65 = vpop.permute.xlu0 %64
    %vm66 = vcmp.eq.s32.totalorder %v65, %v62
    %v67 = vsel %vm66, 1, 0
    %v68 = vcvt.s32.f32 %v67
    %69 = vset.pattern.permute.xlu0 1
    %70 = vperm.xlu0 %69, %v60
    %v71 = vpop.permute.xlu0 %70
    %vm72 = vcmp.eq.s32.totalorder %v71, %v62
    %v73 = vsel %vm72, 1, 0
    %v74 = vcvt.s32.f32 %v73
    %75 = vset.pattern.permute.xlu0 2
    %76 = vperm.xlu0 %75, %v60
    %v77 = vpop.permute.xlu0 %76
    %vm78 = vcmp.eq.s32.totalorder %v77, %v62
    %v79 = vsel %vm78, 1, 0
    %v80 = vcvt.s32.f32 %v79
    %81 = vset.pattern.permute.xlu0 3
    %82 = vperm.xlu0 %81, %v60
    %v83 = vpop.permute.xlu0 %82
    %vm84 = vcmp.eq.s32.totalorder %v83, %v62
    %v85 = vsel %vm84, 1, 0
    %v86 = vcvt.s32.f32 %v85
    %87 = vset.pattern.permute.xlu0 4
    %88 = vperm.xlu0 %87, %v60
    %v89 = vpop.permute.xlu0 %88
    %vm90 = vcmp.eq.s32.totalorder %v89, %v62
    %v91 = vsel %vm90, 1, 0
    %v92 = vcvt.s32.f32 %v91
    %v93 = vld [vmem:[#allocation5] sm:$0xff]
    %v94 = vld [vmem:[#allocation5 + $0x8] sm:$0xff]
    %v95 = vld [vmem:[#allocation5 + $0x10] sm:$0xff]
    %v96 = vld [vmem:[#allocation5 + $0x18] sm:$0xff]
    %v97 = vld [vmem:[#allocation5 + $0x20] sm:$0xff]
    %v98 = vld [vmem:[#allocation5 + $0x28] sm:$0xff]
    %v99 = vld [vmem:[#allocation5 + $0x30] sm:$0xff]
    %v100 = vld [vmem:[#allocation5 + $0x38] sm:$0xff]
    %v101 = vld [vmem:[#allocation5 + $0x40] sm:$0xff]
    %v102 = vld [vmem:[#allocation5 + $0x48] sm:$0xff]
    %v103 = vld [vmem:[#allocation5 + $0x50] sm:$0xff]
    %v104 = vld [vmem:[#allocation5 + $0x58] sm:$0xff]
    %v105 = vld [vmem:[#allocation5 + $0x60] sm:$0xff]
    %v106 = vld [vmem:[#allocation5 + $0x68] sm:$0xff]
    %v107 = vld [vmem:[#allocation5 + $0x70] sm:$0xff]
    %v108 = vld [vmem:[#allocation5 + $0x78] sm:$0xff]
    %v109 = vld [vmem:[#allocation5 + $0x80] sm:$0xff]
    %v110 = vld [vmem:[#allocation5 + $0x88] sm:$0xff]
    %v111 = vld [vmem:[#allocation5 + $0x90] sm:$0xff]
    %v112 = vld [vmem:[#allocation5 + $0x98] sm:$0xff]
    %v113 = vld [vmem:[#allocation5 + $0xa0] sm:$0xff]
    %v114 = vld [vmem:[#allocation5 + $0xa8] sm:$0xff]
    %v115 = vld [vmem:[#allocation5 + $0xb0] sm:$0xff]
    %v116 = vld [vmem:[#allocation5 + $0xb8] sm:$0xff]
    %v117 = vld [vmem:[#allocation5 + $0xc0] sm:$0xff]
    %v118 = vld [vmem:[#allocation5 + $0xc8] sm:$0xff]
    %v119 = vld [vmem:[#allocation5 + $0xd0] sm:$0xff]
    %v120 = vld [vmem:[#allocation5 + $0xd8] sm:$0xff]
    %v121 = vld [vmem:[#allocation5 + $0xe0] sm:$0xff]
    %v122 = vld [vmem:[#allocation5 + $0xe8] sm:$0xff]
    %v123 = vld [vmem:[#allocation5 + $0xf0] sm:$0xff]
    %v124 = vld [vmem:[#allocation5 + $0xf8] sm:$0xff]
    %v125 = vld [vmem:[#allocation5 + $0x100] sm:$0xff]
    %v126 = vld [vmem:[#allocation5 + $0x108] sm:$0xff]
    %v127 = vld [vmem:[#allocation5 + $0x110] sm:$0xff]
    %v128 = vld [vmem:[#allocation5 + $0x118] sm:$0xff]
    %v129 = vld [vmem:[#allocation5 + $0x120] sm:$0xff]
    %v130 = vld [vmem:[#allocation5 + $0x128] sm:$0xff]
    %v131 = vld [vmem:[#allocation5 + $0x130] sm:$0xff]
    %v132 = vld [vmem:[#allocation5 + $0x138] sm:$0xff]
    %v133 = vld [vmem:[#allocation5 + $0x140] sm:$0xff]
    %v134 = vld [vmem:[#allocation5 + $0x148] sm:$0xff]
    %v135 = vld [vmem:[#allocation5 + $0x150] sm:$0xff]
    %v136 = vld [vmem:[#allocation5 + $0x158] sm:$0xff]
    %v137 = vld [vmem:[#allocation5 + $0x160] sm:$0xff]
    %v138 = vld [vmem:[#allocation5 + $0x168] sm:$0xff]
    %v139 = vld [vmem:[#allocation5 + $0x170] sm:$0xff]
    %v140 = vld [vmem:[#allocation5 + $0x178] sm:$0xff]
    %v141 = vld [vmem:[#allocation5 + $0x180] sm:$0xff]
    %v142 = vld [vmem:[#allocation5 + $0x188] sm:$0xff]
    %v143 = vld [vmem:[#allocation5 + $0x190] sm:$0xff]
    %v144 = vld [vmem:[#allocation5 + $0x198] sm:$0xff]
    %v145 = vld [vmem:[#allocation5 + $0x1a0] sm:$0xff]
    %v146 = vld [vmem:[#allocation5 + $0x1a8] sm:$0xff]
    %v147 = vld [vmem:[#allocation5 + $0x1b0] sm:$0xff]
    %v148 = vld [vmem:[#allocation5 + $0x1b8] sm:$0xff]
    %v149 = vld [vmem:[#allocation5 + $0x1c0] sm:$0xff]
    %v150 = vld [vmem:[#allocation5 + $0x1c8] sm:$0xff]
    %v151 = vld [vmem:[#allocation5 + $0x1d0] sm:$0xff]
    %v152 = vld [vmem:[#allocation5 + $0x1d8] sm:$0xff]
    %v153 = vld [vmem:[#allocation5 + $0x1e0] sm:$0xff]
    %v154 = vld [vmem:[#allocation5 + $0x1e8] sm:$0xff]
    %v155 = vld [vmem:[#allocation5 + $0x1f0] sm:$0xff]
    %v156 = vld [vmem:[#allocation5 + $0x1f8] sm:$0xff]
    %v157 = vld [vmem:[#allocation5 + $0x200] sm:$0xff]
    %v158 = vld [vmem:[#allocation5 + $0x208] sm:$0xff]
    %v159 = vld [vmem:[#allocation5 + $0x210] sm:$0xff]
    %v160 = vld [vmem:[#allocation5 + $0x218] sm:$0xff]
    %v161 = vld [vmem:[#allocation5 + $0x220] sm:$0xff]
    %v162 = vld [vmem:[#allocation5 + $0x228] sm:$0xff]
    %v163 = vld [vmem:[#allocation5 + $0x230] sm:$0xff]
    %v164 = vld [vmem:[#allocation5 + $0x238] sm:$0xff]
    %v165 = vld [vmem:[#allocation5 + $0x240] sm:$0xff]
    %v166 = vld [vmem:[#allocation5 + $0x248] sm:$0xff]
    %v167 = vld [vmem:[#allocation5 + $0x250] sm:$0xff]
    %v168 = vld [vmem:[#allocation5 + $0x258] sm:$0xff]
    %v169 = vld [vmem:[#allocation5 + $0x260] sm:$0xff]
    %v170 = vld [vmem:[#allocation5 + $0x268] sm:$0xff]
    %v171 = vld [vmem:[#allocation5 + $0x270] sm:$0xff]
    %v172 = vld [vmem:[#allocation5 + $0x278] sm:$0xff]
    %v173 = vld [vmem:[%s2] sm:$0x1]
    %v175 = vlaneseq
    %v176 = vshrl.u32 %v175, 7
    %v177 = vsub.s32 0, %v176
    %v178 = vrot.slane %v173, %v177
    %180 = vmatprep.subr.mxu0 0.0
    %181 = vmatpush1.msra.mxu0 %v93
    %182 = vmatprep.subr.mxu0 0.0
    %183 = vmatpush1.msra.mxu0 %v94
    %184 = vmatprep.subr.mxu0 0.0
    %185 = vmatpush1.msra.mxu0 %v95
    %186 = vmatprep.subr.mxu0 0.0
    %187 = vmatpush1.msra.mxu0 %v96
    %188 = vmatprep.subr.mxu0 0.0
    %189 = vmatpush1.msra.mxu0 %v97
    %190 = vmatprep.subr.mxu0 0.0
    %191 = vmatpush1.msra.mxu0 %v98
    %192 = vmatprep.subr.mxu0 0.0
    %193 = vmatpush1.msra.mxu0 %v99
    %194 = vmatprep.subr.mxu0 0.0
    %195 = vmatpush1.msra.mxu0 %v100
    %196 = vmatprep.subr.mxu0 0.0
    %197 = vmatpush1.msra.mxu0 %v101
    %198 = vmatprep.subr.mxu0 0.0
    %199 = vmatpush1.msra.mxu0 %v102
    %200 = vmatprep.subr.mxu0 0.0
    %201 = vmatpush1.msra.mxu0 %v103
    %202 = vmatprep.subr.mxu0 0.0
    %203 = vmatpush1.msra.mxu0 %v104
    %204 = vmatprep.subr.mxu0 0.0
    %205 = vmatpush1.msra.mxu0 %v105
    %206 = vmatprep.subr.mxu0 0.0
    %207 = vmatpush1.msra.mxu0 %v106
    %208 = vmatprep.subr.mxu0 0.0
    %209 = vmatpush1.msra.mxu0 %v107
    %210 = vmatprep.subr.mxu0 0.0
    %211 = vmatpush1.msra.mxu0 %v108
    %212 = vmatprep.subr.mxu0 0.0
    %213 = vmatpush1.msra.mxu0 %v109
    %214 = vmatprep.subr.mxu0 0.0
    %215 = vmatpush1.msra.mxu0 %v110
    %216 = vmatprep.subr.mxu0 0.0
    %217 = vmatpush1.msra.mxu0 %v111
    %218 = vmatprep.subr.mxu0 0.0
    %219 = vmatpush1.msra.mxu0 %v112
    %220 = vmatprep.subr.mxu0 0.0
    %221 = vmatpush1.msra.mxu0 %v113
    %222 = vmatprep.subr.mxu0 0.0
    %223 = vmatpush1.msra.mxu0 %v114
    %224 = vmatprep.subr.mxu0 0.0
    %225 = vmatpush1.msra.mxu0 %v115
    %226 = vmatprep.subr.mxu0 0.0
    %227 = vmatpush1.msra.mxu0 %v116
    %228 = vmatprep.subr.mxu0 0.0
    %229 = vmatpush1.msra.mxu0 %v117
    %230 = vmatprep.subr.mxu0 0.0
    %231 = vmatpush1.msra.mxu0 %v118
    %232 = vmatprep.subr.mxu0 0.0
    %233 = vmatpush1.msra.mxu0 %v119
    %234 = vmatprep.subr.mxu0 0.0
    %235 = vmatpush1.msra.mxu0 %v120
    %236 = vmatprep.subr.mxu0 0.0
    %237 = vmatpush1.msra.mxu0 %v121
    %238 = vmatprep.subr.mxu0 0.0
    %239 = vmatpush1.msra.mxu0 %v122
    %240 = vmatprep.subr.mxu0 0.0
    %241 = vmatpush1.msra.mxu0 %v123
    %242 = vmatprep.subr.mxu0 0.0
    %243 = vmatpush1.msra.mxu0 %v124
    %244 = vmatprep.mubr.f32.mxu0 %v74
    %245 = vmatmul.mubr.f32.gmra.mrb[0].mxu0 %v68
    %v246 = vpop.f32.mrb[0].mxu0
    %v247 = vadd.f32 %v178, %v246
    %v248 = vpop.f32.mrb[0].mxu0
    %249 = vdwg.mxu0
    %250 = vmatprep.subr.mxu0 0.0
    %251 = vmatpush1.msra.mxu0 %v125
    %252 = vmatprep.subr.mxu0 0.0
    %253 = vmatpush1.msra.mxu0 %v126
    %254 = vmatprep.subr.mxu0 0.0
    %255 = vmatpush1.msra.mxu0 %v127
    %256 = vmatprep.subr.mxu0 0.0
    %257 = vmatpush1.msra.mxu0 %v128
    %258 = vmatprep.subr.mxu0 0.0
    %259 = vmatpush1.msra.mxu0 %v129
    %260 = vmatprep.subr.mxu0 0.0
    %261 = vmatpush1.msra.mxu0 %v130
    %262 = vmatprep.subr.mxu0 0.0
    %263 = vmatpush1.msra.mxu0 %v131
    %264 = vmatprep.subr.mxu0 0.0
    %265 = vmatpush1.msra.mxu0 %v132
    %266 = vmatprep.subr.mxu0 0.0
    %267 = vmatpush1.msra.mxu0 %v133
    %268 = vmatprep.subr.mxu0 0.0
    %269 = vmatpush1.msra.mxu0 %v134
    %270 = vmatprep.subr.mxu0 0.0
    %271 = vmatpush1.msra.mxu0 %v135
    %272 = vmatprep.subr.mxu0 0.0
    %273 = vmatpush1.msra.mxu0 %v136
    %274 = vmatprep.subr.mxu0 0.0
    %275 = vmatpush1.msra.mxu0 %v137
    %276 = vmatprep.subr.mxu0 0.0
    %277 = vmatpush1.msra.mxu0 %v138
    %278 = vmatprep.subr.mxu0 0.0
    %279 = vmatpush1.msra.mxu0 %v139
    %280 = vmatprep.subr.mxu0 0.0
    %281 = vmatpush1.msra.mxu0 %v140
    %282 = vmatprep.subr.mxu0 0.0
    %283 = vmatpush1.msra.mxu0 %v141
    %284 = vmatprep.subr.mxu0 0.0
    %285 = vmatpush1.msra.mxu0 %v142
    %286 = vmatprep.subr.mxu0 0.0
    %287 = vmatpush1.msra.mxu0 %v143
    %288 = vmatprep.subr.mxu0 0.0
    %289 = vmatpush1.msra.mxu0 %v144
    %290 = vmatprep.subr.mxu0 0.0
    %291 = vmatpush1.msra.mxu0 %v145
    %292 = vmatprep.subr.mxu0 0.0
    %293 = vmatpush1.msra.mxu0 %v146
    %294 = vmatprep.subr.mxu0 0.0
    %295 = vmatpush1.msra.mxu0 %v147
    %296 = vmatprep.subr.mxu0 0.0
    %297 = vmatpush1.msra.mxu0 %v148
    %298 = vmatprep.subr.mxu0 0.0
    %299 = vmatpush1.msra.mxu0 %v149
    %300 = vmatprep.subr.mxu0 0.0
    %301 = vmatpush1.msra.mxu0 %v150
    %302 = vmatprep.subr.mxu0 0.0
    %303 = vmatpush1.msra.mxu0 %v151
    %304 = vmatprep.subr.mxu0 0.0
    %305 = vmatpush1.msra.mxu0 %v152
    %306 = vmatprep.subr.mxu0 0.0
    %307 = vmatpush1.msra.mxu0 %v153
    %308 = vmatprep.subr.mxu0 0.0
    %309 = vmatpush1.msra.mxu0 %v154
    %310 = vmatprep.subr.mxu0 0.0
    %311 = vmatpush1.msra.mxu0 %v155
    %312 = vmatprep.subr.mxu0 0.0
    %313 = vmatpush1.msra.mxu0 %v156
    %314 = vmatprep.mubr.f32.mxu0 %v86
    %315 = vmatmul.mubr.f32.gmra.mrb[0].mxu0 %v80
    %v316 = vpop.f32.mrb[0].mxu0
    %v317 = vadd.f32 %v247, %v316
    %v318 = vpop.f32.mrb[0].mxu0
    %319 = vdwg.mxu0
    %320 = vmatprep.subr.mxu0 0.0
    %321 = vmatpush1.msra.mxu0 %v157
    %322 = vmatprep.subr.mxu0 0.0
    %323 = vmatpush1.msra.mxu0 %v158
    %324 = vmatprep.subr.mxu0 0.0
    %325 = vmatpush1.msra.mxu0 %v159
    %326 = vmatprep.subr.mxu0 0.0
    %327 = vmatpush1.msra.mxu0 %v160
    %328 = vmatprep.subr.mxu0 0.0
    %329 = vmatpush1.msra.mxu0 %v161
    %330 = vmatprep.subr.mxu0 0.0
    %331 = vmatpush1.msra.mxu0 %v162
    %332 = vmatprep.subr.mxu0 0.0
    %333 = vmatpush1.msra.mxu0 %v163
    %334 = vmatprep.subr.mxu0 0.0
    %335 = vmatpush1.msra.mxu0 %v164
    %336 = vmatprep.subr.mxu0 0.0
    %337 = vmatpush1.msra.mxu0 %v165
    %338 = vmatprep.subr.mxu0 0.0
    %339 = vmatpush1.msra.mxu0 %v166
    %340 = vmatprep.subr.mxu0 0.0
    %341 = vmatpush1.msra.mxu0 %v167
    %342 = vmatprep.subr.mxu0 0.0
    %343 = vmatpush1.msra.mxu0 %v168
    %344 = vmatprep.subr.mxu0 0.0
    %345 = vmatpush1.msra.mxu0 %v169
    %346 = vmatprep.subr.mxu0 0.0
    %347 = vmatpush1.msra.mxu0 %v170
    %348 = vmatprep.subr.mxu0 0.0
    %349 = vmatpush1.msra.mxu0 %v171
    %350 = vmatprep.subr.mxu0 0.0
    %351 = vmatpush1.msra.mxu0 %v172
    %352 = vmatprep.subr.mxu0 0.0
    %353 = vmatpush1.msra.mxu0 0.0
    %354 = vmatprep.subr.mxu0 0.0
    %355 = vmatpush1.msra.mxu0 0.0
    %356 = vmatprep.subr.mxu0 0.0
    %357 = vmatpush1.msra.mxu0 0.0
    %358 = vmatprep.subr.mxu0 0.0
    %359 = vmatpush1.msra.mxu0 0.0
    %360 = vmatprep.subr.mxu0 0.0
    %361 = vmatpush1.msra.mxu0 0.0
    %362 = vmatprep.subr.mxu0 0.0
    %363 = vmatpush1.msra.mxu0 0.0
    %364 = vmatprep.subr.mxu0 0.0
    %365 = vmatpush1.msra.mxu0 0.0
    %366 = vmatprep.subr.mxu0 0.0
    %367 = vmatpush1.msra.mxu0 0.0
    %368 = vmatprep.subr.mxu0 0.0
    %369 = vmatpush1.msra.mxu0 0.0
    %370 = vmatprep.subr.mxu0 0.0
    %371 = vmatpush1.msra.mxu0 0.0
    %372 = vmatprep.subr.mxu0 0.0
    %373 = vmatpush1.msra.mxu0 0.0
    %374 = vmatprep.subr.mxu0 0.0
    %375 = vmatpush1.msra.mxu0 0.0
    %376 = vmatprep.subr.mxu0 0.0
    %377 = vmatpush1.msra.mxu0 0.0
    %378 = vmatprep.subr.mxu0 0.0
    %379 = vmatpush1.msra.mxu0 0.0
    %380 = vmatprep.subr.mxu0 0.0
    %381 = vmatpush1.msra.mxu0 0.0
    %382 = vmatprep.subr.mxu0 0.0
    %383 = vmatpush1.msra.mxu0 0.0
    %384 = vmatprep.mubr.f32.mxu0 0.0
    %385 = vmatmul.mubr.f32.gmra.mrb[0].mxu0 %v92
    %v386 = vpop.f32.mrb[0].mxu0
    %v387 = vadd.f32 %v317, %v386
    %v388 = vpop.f32.mrb[0].mxu0
    %389 = vdwg.mxu0
    %v390 = vtanh.pop %v387
    %v391 = vld [vmem:[#allocation7] sm:$0xff]
    %v392 = vld [vmem:[#allocation7 + $0x8] sm:$0xff]
    %v393 = vld [vmem:[#allocation7 + $0x10] sm:$0xff]
    %v394 = vld [vmem:[#allocation7 + $0x18] sm:$0xff]
    %v395 = vld [vmem:[#allocation7 + $0x20] sm:$0xff]
    %v396 = vld [vmem:[#allocation7 + $0x28] sm:$0xff]
    %v397 = vld [vmem:[#allocation7 + $0x30] sm:$0xff]
    %v398 = vld [vmem:[#allocation7 + $0x38] sm:$0xff]
    %v399 = vld [vmem:[#allocation7 + $0x40] sm:$0xff]
    %v400 = vld [vmem:[#allocation7 + $0x48] sm:$0xff]
    %v401 = vld [vmem:[#allocation7 + $0x50] sm:$0xff]
    %v402 = vld [vmem:[#allocation7 + $0x58] sm:$0xff]
    %v403 = vld [vmem:[#allocation7 + $0x60] sm:$0xff]
    %v404 = vld [vmem:[#allocation7 + $0x68] sm:$0xff]
    %v405 = vld [vmem:[#allocation7 + $0x70] sm:$0xff]
    %v406 = vld [vmem:[#allocation7 + $0x78] sm:$0xff]
    %v407 = vld [vmem:[%s4] sm:$0x1]
    %v409 = vlaneseq
    %v410 = vshrl.u32 %v409, 7
    %v411 = vsub.s32 0, %v410
    %v412 = vrot.slane %v407, %v411
    %414 = vmatprep.subr.mxu0 0.0
    %415 = vmatpush1.msra.mxu0 %v391
    %416 = vmatprep.subr.mxu0 0.0
    %417 = vmatpush1.msra.mxu0 %v392
    %418 = vmatprep.subr.mxu0 0.0
    %419 = vmatpush1.msra.mxu0 %v393
    %420 = vmatprep.subr.mxu0 0.0
    %421 = vmatpush1.msra.mxu0 %v394
    %422 = vmatprep.subr.mxu0 0.0
    %423 = vmatpush1.msra.mxu0 %v395
    %424 = vmatprep.subr.mxu0 0.0
    %425 = vmatpush1.msra.mxu0 %v396
    %426 = vmatprep.subr.mxu0 0.0
    %427 = vmatpush1.msra.mxu0 %v397
    %428 = vmatprep.subr.mxu0 0.0
    %429 = vmatpush1.msra.mxu0 %v398
    %430 = vmatprep.subr.mxu0 0.0
    %431 = vmatpush1.msra.mxu0 %v399
    %432 = vmatprep.subr.mxu0 0.0
    %433 = vmatpush1.msra.mxu0 %v400
    %434 = vmatprep.subr.mxu0 0.0
    %435 = vmatpush1.msra.mxu0 %v401
    %436 = vmatprep.subr.mxu0 0.0
    %437 = vmatpush1.msra.mxu0 %v402
    %438 = vmatprep.subr.mxu0 0.0
    %439 = vmatpush1.msra.mxu0 %v403
    %440 = vmatprep.subr.mxu0 0.0
    %441 = vmatpush1.msra.mxu0 %v404
    %442 = vmatprep.subr.mxu0 0.0
    %443 = vmatpush1.msra.mxu0 %v405
    %444 = vmatprep.subr.mxu0 0.0
    %445 = vmatpush1.msra.mxu0 %v406
    %446 = vmatprep.subr.mxu0 0.0
    %447 = vmatpush1.msra.mxu0 0.0
    %448 = vmatprep.subr.mxu0 0.0
    %449 = vmatpush1.msra.mxu0 0.0
    %450 = vmatprep.subr.mxu0 0.0
    %451 = vmatpush1.msra.mxu0 0.0
    %452 = vmatprep.subr.mxu0 0.0
    %453 = vmatpush1.msra.mxu0 0.0
    %454 = vmatprep.subr.mxu0 0.0
    %455 = vmatpush1.msra.mxu0 0.0
    %456 = vmatprep.subr.mxu0 0.0
    %457 = vmatpush1.msra.mxu0 0.0
    %458 = vmatprep.subr.mxu0 0.0
    %459 = vmatpush1.msra.mxu0 0.0
    %460 = vmatprep.subr.mxu0 0.0
    %461 = vmatpush1.msra.mxu0 0.0
    %462 = vmatprep.subr.mxu0 0.0
    %463 = vmatpush1.msra.mxu0 0.0
    %464 = vmatprep.subr.mxu0 0.0
    %465 = vmatpush1.msra.mxu0 0.0
    %466 = vmatprep.subr.mxu0 0.0
    %467 = vmatpush1.msra.mxu0 0.0
    %468 = vmatprep.subr.mxu0 0.0
    %469 = vmatpush1.msra.mxu0 0.0
    %470 = vmatprep.subr.mxu0 0.0
    %471 = vmatpush1.msra.mxu0 0.0
    %472 = vmatprep.subr.mxu0 0.0
    %473 = vmatpush1.msra.mxu0 0.0
    %474 = vmatprep.subr.mxu0 0.0
    %475 = vmatpush1.msra.mxu0 0.0
    %476 = vmatprep.subr.mxu0 0.0
    %477 = vmatpush1.msra.mxu0 0.0
    %478 = vmatprep.mubr.f32.mxu0 0.0
    %479 = vmatmul.mubr.f32.gmra.mrb[0].mxu0 %v390
    %v480 = vpop.f32.mrb[0].mxu0
    %v481 = vadd.f32 %v412, %v480
    %v482 = vpop.f32.mrb[0].mxu0
    %483 = vdwg.mxu0
    %484 = vst [vmem:[#allocation8] sm:$0xff] %v481
    // Predicated region
    $region34: #{embnet_forward.1} parent=1 // pred_check
      _
    $region35: #{embnet_forward.1} parent=1 // pred_check_branch
      %486 = sbr.rel (0) target = $region37
    $region36: #{embnet_forward.1} parent=1 // pred_region
      %s488 = ssub.s32 128, 128
      %489 = vsyncadd [#allocation4], %s488
      %s491 = sshll.u32 [#allocation8], 4
      %s492 = int_to_ptr.vmem [resolvable:$true] %s491
      %494 = dma.vmem_to_hbm [thread:$0]  %s492, 128, %s5, [#allocation4]
    $region37: #{embnet_forward.1} parent=1 // pred_fallthru
      _
    // Predicated region
    $region38: #{embnet_forward.1} parent=1 // pred_check
      _
    $region39: #{embnet_forward.1} parent=1 // pred_check_branch
      %496 = sbr.rel (0) target = $region41
    $region40: #{embnet_forward.1} parent=1 // pred_region
      %497 = dma.done [#allocation4], 128
    $region41: #{embnet_forward.1} parent=1 // pred_fallthru
      _
    %498 = vsyncpa [#allocation3], 1
    %499 = vsyncpa [#allocation6], 1
    %500 = vsyncpa [#allocation4], 1

</llo_original>
